<compile_context>
chip_gen: v6e
topology: v6e:2x2x1
jax: 0.10.0
libtpu: 0.0.40
codegen_flags: <defaults>
</compile_context>

<pallas_src>
import functools

import jax
import jax.numpy as jnp
from jax.experimental import pallas as pl
from jax.experimental.pallas import tpu as pltpu

_LANE = 128      # vreg lane width
_SUBLANE = 8     # f32 sublane count


def _round_up(n: int, m: int) -> int:
    return ((n + m - 1) // m) * m


def _pad2(a, rows: int, cols: int):
    r, c = a.shape
    if r == rows and c == cols:
        return a
    return jnp.pad(a, ((0, rows - r), (0, cols - c)))


@functools.lru_cache(maxsize=1)
def _vmem_capacity_bytes() -> int:
    """Physical VMEM per core; conservative (v7x-sized) default if unavailable."""
    try:
        return int(pltpu.get_tpu_info().vmem_capacity_bytes)
    except Exception:
        return 64 << 20


@functools.lru_cache(maxsize=1)
def _single_buffer_supported() -> bool:
    """One-time capability probe: does pipeline_mode=pl.Buffered(1) lower & run here?

    This is a probe on a trivial kernel only; errors from the real kernel are NOT caught.
    """
    def k(x_ref, w_ref, o_ref):
        o_ref[...] = x_ref[...] + w_ref[...]

    try:
        f = pl.pallas_call(
            k,
            out_shape=jax.ShapeDtypeStruct((16, 128), jnp.float32),
            grid_spec=pltpu.PrefetchScalarGridSpec(
                num_scalar_prefetch=0,
                grid=(2,),
                in_specs=[
                    pl.BlockSpec((8, 128), lambda i: (i, 0)),
                    pl.BlockSpec((8, 128), lambda i: (0, 0),
                                 pipeline_mode=pl.Buffered(1)),
                ],
                out_specs=pl.BlockSpec((8, 128), lambda i: (i, 0)),
            ),
        )
        jax.block_until_ready(f(jnp.zeros((16, 128), jnp.float32),
                                jnp.zeros((8, 128), jnp.float32)))
        return True
    except Exception:
        return False


def _choose_batch_tile(batch: int) -> int:
    """Multiple-of-8 row tile. Big enough to amortize the ~0.35us/step overhead and feed
    the MXU with M, small enough to give >=2 (even, for v7x's 2 TCs) grid steps."""
    cap = 2048 if _vmem_capacity_bytes() >= (96 << 20) else 512
    if batch < 2 * _SUBLANE:
        return _round_up(max(batch, 1), _SUBLANE)
    steps = max(2, pl.cdiv(batch, cap))
    if steps % 2:
        steps += 1          # even step count -> balanced across 2 TensorCores on v7x
    return max(_SUBLANE, _round_up(pl.cdiv(batch, steps), _SUBLANE))


def _mlp_kernel(x_ref, *refs, depth: int):
    """Fused MLP: `depth` x (Linear + ReLU) then a final Linear.

    refs = (w0, b0, w1, b1, ..., w_depth, b_depth, out_ref).
    Weights are lane-padded (bf16 on the fast path); biases stay f32.
    Matmuls accumulate in f32 on the MXU; bias-add / ReLU run in f32 (v5e-safe).
    """
    out_ref = refs[-1]
    params = refs[:-1]

    h = x_ref[...]                                   # already in the compute dtype
    for layer in range(depth):
        w = params[2 * layer][...]
        b = params[2 * layer + 1][...]               # (1, hidden_pad) f32
        acc = jnp.dot(h, w, preferred_element_type=jnp.float32)
        h = jnp.maximum(acc + b, 0.0).astype(w.dtype)
    y = jnp.dot(h, params[2 * depth][...], preferred_element_type=jnp.float32)
    y = y + params[2 * depth + 1][...]               # (1, output_size) f32
    out_ref[...] = y.astype(out_ref.dtype)           # native-width store


@functools.partial(
    jax.jit,
    static_argnames=("batch_tile", "use_bf16", "single_buffer", "vmem_limit"))
def _forward_impl(x, weights, biases, *, batch_tile, use_bf16, single_buffer, vmem_limit):
    depth = len(weights) - 1
    B, input_size = x.shape
    output_size = weights[-1].shape[1]
    compute_dtype = jnp.bfloat16 if use_bf16 else jnp.float32

    # Pad only the tiny, VMEM-resident hidden dims to lane multiples. Padded columns have
    # zero weights/bias, ReLU keeps them at exactly 0, so real outputs are unaffected.
    flat_params = []
    prev = input_size
    for li, (w, b) in enumerate(zip(weights, biases)):
        o = w.shape[1]
        o_pad = o if li == depth else _round_up(o, _LANE)
        flat_params.append(_pad2(w, prev, o_pad).astype(compute_dtype))
        flat_params.append(_pad2(b, 1, o_pad).astype(jnp.float32))
        prev = o_pad

    b_padded = _round_up(B, batch_tile)
    x_p = _pad2(x.astype(compute_dtype), b_padded, input_size)   # bf16 read, native width
    grid = (b_padded // batch_tile,)

    param_kwargs = {"pipeline_mode": pl.Buffered(1)} if single_buffer else {}
    in_specs = [pl.BlockSpec((batch_tile, input_size), lambda i: (i, 0))]
    for p in flat_params:
        in_specs.append(pl.BlockSpec(p.shape, lambda i: (0, 0), **param_kwargs))
    out_spec = pl.BlockSpec((batch_tile, output_size), lambda i: (i, 0))

    out_padded = pl.pallas_call(
        functools.partial(_mlp_kernel, depth=depth),
        out_shape=jax.ShapeDtypeStruct((b_padded, output_size), jnp.float32),
        grid_spec=pltpu.PrefetchScalarGridSpec(
            num_scalar_prefetch=0,
            grid=grid,
            in_specs=in_specs,
            out_specs=out_spec,
        ),
        compiler_params=pltpu.CompilerParams(
            dimension_semantics=("parallel",),
            vmem_limit_bytes=vmem_limit,
        ),
    )(x_p, *flat_params)

    return out_padded[:B, :]        # fused into the same executable by jit


def nn_complex_forward(x, weights, biases, *, batch_tile=None, use_bf16=True):
    """NN_complex forward pass as a single fused Pallas TPU kernel.

    x:       (B, input_size) float32
    weights: list of arrays, weights[i] has shape (in_i, out_i)
    biases:  list of arrays, biases[i] has shape (1, out_i)
    """
    B, input_size = x.shape
    depth = len(weights) - 1
    output_size = weights[-1].shape[1]
    itemsize = 2 if use_bf16 else 4

    if batch_tile is None:
        batch_tile = _choose_batch_tile(B)
    batch_tile = max(_SUBLANE, _round_up(int(batch_tile), _SUBLANE))

    single_buffer = _single_buffer_supported()

    # Realistic VMEM budget (no double hedge): double-buffered x/out tiles, resident
    # params (x2 only when Buffered(1) is unavailable), f32 activation temporaries.
    padded_dims = [input_size]
    for li, w in enumerate(weights):
        o = w.shape[1]
        padded_dims.append(o if li == depth else _round_up(o, _LANE))
    param_bytes, prev = 0, input_size
    for li in range(len(weights)):
        o_pad = padded_dims[li + 1]
        param_bytes += prev * o_pad * itemsize + o_pad * 4
        prev = o_pad
    param_mult = 1 if single_buffer else 2
    widest = max(padded_dims)
    need = (2 * batch_tile * input_size * itemsize
            + 2 * batch_tile * output_size * 4
            + param_mult * param_bytes
            + 3 * batch_tile * widest * 4
            + (2 << 20))
    vmem_cap = (_vmem_capacity_bytes() * 3) // 4      # 48 MiB on v7x, 96 MiB on v5e/v6e
    vmem_limit = int(min(max(need, 16 << 20), vmem_cap))

    return _forward_impl(x, tuple(weights), tuple(biases),
                         batch_tile=int(batch_tile),
                         use_bf16=bool(use_bf16),
                         single_buffer=bool(single_buffer),
                         vmem_limit=vmem_limit)


def init_params(key, input_size, hidden_width, depth, output_size):
    """Deterministic parameter init matching the PyTorch module's shapes."""
    weights, biases = [], []
    in_dim = input_size
    dims = [hidden_width] * depth + [output_size]
    for out_dim in dims:
        key, kw, kb = jax.random.split(key, 3)
        bound = 1.0 / jnp.sqrt(in_dim)
        # Stored as (in, out) == transpose of PyTorch Linear's (out, in) layout.
        w = jax.random.uniform(kw, (in_dim, out_dim), jnp.float32, -bound, bound)
        b = jax.random.uniform(kb, (1, out_dim), jnp.float32, -bound, bound)
        weights.append(w)
        biases.append(b)
        in_dim = out_dim
    return weights, biases


def reference_forward(x, weights, biases, *, use_bf16=True):
    """Pure-JAX reference with the same precision policy as the kernel."""
    cdt = jnp.bfloat16 if use_bf16 else jnp.float32
    h = x.astype(jnp.float32)
    for w, b in zip(weights[:-1], biases[:-1]):
        acc = jnp.dot(h.astype(cdt), w.astype(cdt),
                      preferred_element_type=jnp.float32)
        h = jnp.maximum(acc + b, 0.0)
    acc = jnp.dot(h.astype(cdt), weights[-1].astype(cdt),
                  preferred_element_type=jnp.float32)
    return acc + biases[-1]


if __name__ == "__main__":
    # Config analogous to the PyTorch module's `config` dict.
    input_size = 16
    hidden_width = 32
    depth = 3
    output_size = 1
    batch = 8

    key = jax.random.PRNGKey(0)
    key, kx = jax.random.split(key)
    x = jax.random.normal(kx, (batch, input_size), jnp.float32)

    weights, biases = init_params(key, input_size, hidden_width, depth, output_size)

    out = nn_complex_forward(x, weights, biases)
    out = jax.block_until_ready(out)

    ref = reference_forward(x, weights, biases)
    assert out.shape == (batch, output_size)
    assert jnp.allclose(out, ref, atol=1e-3, rtol=1e-3), "mismatch vs reference"
    print("KERNEL_OK")
</pallas_src>

<mosaic_0001>
module attributes {stable_mosaic.version = 11 : i64} {
  func.func @k(%arg0: i32, %arg1: memref<8x128xf32, #tpu.memory_space<vmem>>, %arg2: memref<8x128xf32, #tpu.memory_space<vmem>>, %arg3: memref<8x128xf32, #tpu.memory_space<vmem>>) attributes {dimension_semantics = [#tpu.dimension_semantics<arbitrary>], iteration_bounds = array<i64: 2>, scalar_prefetch = 0 : i64, scratch_operands = 0 : i64, tpu.core_type = #tpu.core_type<tc>, window_params = [{transform_indices = @transform_0, window_bounds = array<i64: 8, 128>}, {pipeline_mode = #tpu.pipeline_mode<synchronous>, transform_indices = @transform_1, window_bounds = array<i64: 8, 128>}, {transform_indices = @transform_2, window_bounds = array<i64: 8, 128>}]} {
    %c0 = arith.constant 0 : index
    %c0_0 = arith.constant 0 : index
    %0 = vector.load %arg1[%c0, %c0_0] : memref<8x128xf32, #tpu.memory_space<vmem>>, vector<8x128xf32>
    %c0_1 = arith.constant 0 : index
    %c0_2 = arith.constant 0 : index
    %1 = vector.load %arg2[%c0_1, %c0_2] : memref<8x128xf32, #tpu.memory_space<vmem>>, vector<8x128xf32>
    %2 = arith.addf %0, %1 : vector<8x128xf32>
    %c0_3 = arith.constant 0 : index
    %c0_4 = arith.constant 0 : index
    %3 = vector.load %arg3[%c0_3, %c0_4] : memref<8x128xf32, #tpu.memory_space<vmem>>, vector<8x128xf32>
    tpu.vector_store %arg3[%c0_3, %c0_4], %2 {strides = array<i32>} : memref<8x128xf32, #tpu.memory_space<vmem>>, vector<8x128xf32>,
    return
  }
  func.func @transform_0(%arg0: i32) -> (i32, i32) {
    %c0_i32 = arith.constant 0 : i32
    %c0_i32_0 = arith.constant 0 : i32
    return %arg0, %c0_i32 : i32, i32
  }
  func.func @transform_1(%arg0: i32) -> (i32, i32) {
    %c0_i32 = arith.constant 0 : i32
    %c0_i32_0 = arith.constant 0 : i32
    %c0_i32_1 = arith.constant 0 : i32
    return %c0_i32, %c0_i32_0 : i32, i32
  }
  func.func @transform_2(%arg0: i32) -> (i32, i32) {
    %c0_i32 = arith.constant 0 : i32
    %c0_i32_0 = arith.constant 0 : i32
    return %arg0, %c0_i32 : i32, i32
  }
}

module attributes {stable_mosaic.version = 11 : i64} {
  func.func @_mlp_kernel(%arg0: i32, %arg1: memref<8x16xbf16, #tpu.memory_space<vmem>>, %arg2: memref<16x128xbf16, #tpu.memory_space<vmem>>, %arg3: memref<1x128xf32, #tpu.memory_space<vmem>>, %arg4: memref<128x128xbf16, #tpu.memory_space<vmem>>, %arg5: memref<1x128xf32, #tpu.memory_space<vmem>>, %arg6: memref<128x128xbf16, #tpu.memory_space<vmem>>, %arg7: memref<1x128xf32, #tpu.memory_space<vmem>>, %arg8: memref<128x1xbf16, #tpu.memory_space<vmem>>, %arg9: memref<1x1xf32, #tpu.memory_space<vmem>>, %arg10: memref<8x1xf32, #tpu.memory_space<vmem>>) attributes {dimension_semantics = [#tpu.dimension_semantics<parallel>], iteration_bounds = array<i64: 1>, scalar_prefetch = 0 : i64, scratch_operands = 0 : i64, tpu.core_type = #tpu.core_type<tc>, window_params = [{transform_indices = @transform_0, window_bounds = array<i64: 8, 16>}, {pipeline_mode = #tpu.pipeline_mode<synchronous>, transform_indices = @transform_1, window_bounds = array<i64: 16, 128>}, {pipeline_mode = #tpu.pipeline_mode<synchronous>, transform_indices = @transform_2, window_bounds = array<i64: 1, 128>}, {pipeline_mode = #tpu.pipeline_mode<synchronous>, transform_indices = @transform_3, window_bounds = array<i64: 128, 128>}, {pipeline_mode = #tpu.pipeline_mode<synchronous>, transform_indices = @transform_4, window_bounds = array<i64: 1, 128>}, {pipeline_mode = #tpu.pipeline_mode<synchronous>, transform_indices = @transform_5, window_bounds = array<i64: 128, 128>}, {pipeline_mode = #tpu.pipeline_mode<synchronous>, transform_indices = @transform_6, window_bounds = array<i64: 1, 128>}, {pipeline_mode = #tpu.pipeline_mode<synchronous>, transform_indices = @transform_7, window_bounds = array<i64: 128, 1>}, {pipeline_mode = #tpu.pipeline_mode<synchronous>, transform_indices = @transform_8, window_bounds = array<i64: 1, 1>}, {transform_indices = @transform_9, window_bounds = array<i64: 8, 1>}]} {
    %c0 = arith.constant 0 : index
    %c0_0 = arith.constant 0 : index
    %0 = vector.load %arg1[%c0, %c0_0] : memref<8x16xbf16, #tpu.memory_space<vmem>>, vector<8x16xbf16>
    %c0_1 = arith.constant 0 : index
    %c0_2 = arith.constant 0 : index
    %1 = vector.load %arg2[%c0_1, %c0_2] : memref<16x128xbf16, #tpu.memory_space<vmem>>, vector<16x128xbf16>
    %c0_3 = arith.constant 0 : index
    %c0_4 = arith.constant 0 : index
    %2 = vector.load %arg3[%c0_3, %c0_4] : memref<1x128xf32, #tpu.memory_space<vmem>>, vector<1x128xf32>
    %cst = arith.constant dense<0.000000e+00> : vector<8x128xf32>
    %3 = tpu.matmul %0, %1, %cst {dimension_numbers = #tpu.dot_dimension_numbers<[1], [0], [0], [1], [0, 0, 1, 1], [], []>} : vector<8x16xbf16>, vector<16x128xbf16>, vector<8x128xf32> -> vector<8x128xf32>
    %4 = vector.broadcast %2 : vector<1x128xf32> to vector<8x128xf32>
    %5 = arith.addf %3, %4 : vector<8x128xf32>
    %cst_5 = arith.constant 0.000000e+00 : f32
    %6 = vector.broadcast %cst_5 : f32 to vector<8x128xf32>
    %7 = arith.maximumf %5, %6 : vector<8x128xf32>
    %8 = arith.truncf %7 : vector<8x128xf32> to vector<8x128xbf16>
    %c0_6 = arith.constant 0 : index
    %c0_7 = arith.constant 0 : index
    %9 = vector.load %arg4[%c0_6, %c0_7] : memref<128x128xbf16, #tpu.memory_space<vmem>>, vector<128x128xbf16>
    %c0_8 = arith.constant 0 : index
    %c0_9 = arith.constant 0 : index
    %10 = vector.load %arg5[%c0_8, %c0_9] : memref<1x128xf32, #tpu.memory_space<vmem>>, vector<1x128xf32>
    %cst_10 = arith.constant dense<0.000000e+00> : vector<8x128xf32>
    %11 = tpu.matmul %8, %9, %cst_10 {dimension_numbers = #tpu.dot_dimension_numbers<[1], [0], [0], [1], [0, 0, 1, 1], [], []>} : vector<8x128xbf16>, vector<128x128xbf16>, vector<8x128xf32> -> vector<8x128xf32>
    %12 = vector.broadcast %10 : vector<1x128xf32> to vector<8x128xf32>
    %13 = arith.addf %11, %12 : vector<8x128xf32>
    %cst_11 = arith.constant 0.000000e+00 : f32
    %14 = vector.broadcast %cst_11 : f32 to vector<8x128xf32>
    %15 = arith.maximumf %13, %14 : vector<8x128xf32>
    %16 = arith.truncf %15 : vector<8x128xf32> to vector<8x128xbf16>
    %c0_12 = arith.constant 0 : index
    %c0_13 = arith.constant 0 : index
    %17 = vector.load %arg6[%c0_12, %c0_13] : memref<128x128xbf16, #tpu.memory_space<vmem>>, vector<128x128xbf16>
    %c0_14 = arith.constant 0 : index
    %c0_15 = arith.constant 0 : index
    %18 = vector.load %arg7[%c0_14, %c0_15] : memref<1x128xf32, #tpu.memory_space<vmem>>, vector<1x128xf32>
    %cst_16 = arith.constant dense<0.000000e+00> : vector<8x128xf32>
    %19 = tpu.matmul %16, %17, %cst_16 {dimension_numbers = #tpu.dot_dimension_numbers<[1], [0], [0], [1], [0, 0, 1, 1], [], []>} : vector<8x128xbf16>, vector<128x128xbf16>, vector<8x128xf32> -> vector<8x128xf32>
    %20 = vector.broadcast %18 : vector<1x128xf32> to vector<8x128xf32>
    %21 = arith.addf %19, %20 : vector<8x128xf32>
    %cst_17 = arith.constant 0.000000e+00 : f32
    %22 = vector.broadcast %cst_17 : f32 to vector<8x128xf32>
    %23 = arith.maximumf %21, %22 : vector<8x128xf32>
    %24 = arith.truncf %23 : vector<8x128xf32> to vector<8x128xbf16>
    %c0_18 = arith.constant 0 : index
    %c0_19 = arith.constant 0 : index
    %25 = vector.load %arg8[%c0_18, %c0_19] : memref<128x1xbf16, #tpu.memory_space<vmem>>, vector<128x1xbf16>
    %cst_20 = arith.constant dense<0.000000e+00> : vector<8x1xf32>
    %26 = tpu.matmul %24, %25, %cst_20 {dimension_numbers = #tpu.dot_dimension_numbers<[1], [0], [0], [1], [0, 0, 1, 1], [], []>} : vector<8x128xbf16>, vector<128x1xbf16>, vector<8x1xf32> -> vector<8x1xf32>
    %c0_21 = arith.constant 0 : index
    %c0_22 = arith.constant 0 : index
    %27 = vector.load %arg9[%c0_21, %c0_22] : memref<1x1xf32, #tpu.memory_space<vmem>>, vector<1x1xf32>
    %28 = vector.broadcast %27 : vector<1x1xf32> to vector<8x1xf32>
    %29 = arith.addf %26, %28 : vector<8x1xf32>
    %c0_23 = arith.constant 0 : index
    %c0_24 = arith.constant 0 : index
    %30 = vector.load %arg10[%c0_23, %c0_24] : memref<8x1xf32, #tpu.memory_space<vmem>>, vector<8x1xf32>
    tpu.vector_store %arg10[%c0_23, %c0_24], %29 {strides = array<i32>} : memref<8x1xf32, #tpu.memory_space<vmem>>, vector<8x1xf32>,
    return
  }
  func.func @transform_0(%arg0: i32) -> (i32, i32) {
    %c0_i32 = arith.constant 0 : i32
    %c0_i32_0 = arith.constant 0 : i32
    return %arg0, %c0_i32 : i32, i32
  }
  func.func @transform_1(%arg0: i32) -> (i32, i32) {
    %c0_i32 = arith.constant 0 : i32
    %c0_i32_0 = arith.constant 0 : i32
    %c0_i32_1 = arith.constant 0 : i32
    return %c0_i32, %c0_i32_0 : i32, i32
  }
  func.func @transform_2(%arg0: i32) -> (i32, i32) {
    %c0_i32 = arith.constant 0 : i32
    %c0_i32_0 = arith.constant 0 : i32
    %c0_i32_1 = arith.constant 0 : i32
    return %c0_i32, %c0_i32_0 : i32, i32
  }
  func.func @transform_3(%arg0: i32) -> (i32, i32) {
    %c0_i32 = arith.constant 0 : i32
    %c0_i32_0 = arith.constant 0 : i32
    %c0_i32_1 = arith.constant 0 : i32
    return %c0_i32, %c0_i32_0 : i32, i32
  }
  func.func @transform_4(%arg0: i32) -> (i32, i32) {
    %c0_i32 = arith.constant 0 : i32
    %c0_i32_0 = arith.constant 0 : i32
    %c0_i32_1 = arith.constant 0 : i32
    return %c0_i32, %c0_i32_0 : i32, i32
  }
  func.func @transform_5(%arg0: i32) -> (i32, i32) {
    %c0_i32 = arith.constant 0 : i32
    %c0_i32_0 = arith.constant 0 : i32
    %c0_i32_1 = arith.constant 0 : i32
    return %c0_i32, %c0_i32_0 : i32, i32
  }
  func.func @transform_6(%arg0: i32) -> (i32, i32) {
    %c0_i32 = arith.constant 0 : i32
    %c0_i32_0 = arith.constant 0 : i32
    %c0_i32_1 = arith.constant 0 : i32
    return %c0_i32, %c0_i32_0 : i32, i32
  }
  func.func @transform_7(%arg0: i32) -> (i32, i32) {
    %c0_i32 = arith.constant 0 : i32
    %c0_i32_0 = arith.constant 0 : i32
    %c0_i32_1 = arith.constant 0 : i32
    return %c0_i32, %c0_i32_0 : i32, i32
  }
  func.func @transform_8(%arg0: i32) -> (i32, i32) {
    %c0_i32 = arith.constant 0 : i32
    %c0_i32_0 = arith.constant 0 : i32
    %c0_i32_1 = arith.constant 0 : i32
    return %c0_i32, %c0_i32_0 : i32, i32
  }
  func.func @transform_9(%arg0: i32) -> (i32, i32) {
    %c0_i32 = arith.constant 0 : i32
    %c0_i32_0 = arith.constant 0 : i32
    return %arg0, %c0_i32 : i32, i32
  }
}

</mosaic_0001>

<llo_original>
// kernel: tpu_custom_call.1
$region0: #{tpu_custom_call.1}
  #allocation0 [shape = 'u32[]', space=smem, size = 0x4, offset = 0x4, fixed_abs, tag = 'smem constant byte address 0x4 - core index']
  #allocation1 [shape = 'u32[144,128]{1,0:T(1,128)}', space=vmem, size = 0x12000, scoped, tag = 'internal scratch']
  %s0 = inlined_call_operand.hbm [shape: f32[16,128], index: 0, kind: input, shape index: {}]
  %s1 = inlined_call_operand.hbm [shape: f32[8,128], index: 1, kind: input, shape index: {}]
  %s2 = inlined_call_operand.hbm [shape: f32[16,128], index: 2, kind: output, shape index: {}]
  %s3 = sld [smem:[#allocation0]]
  $region49: #{tpu_custom_call.1} parent=0
    _
  %s5 = ssub.s32 1, %s3
  %s6 = scalar_select 0, %s5, %s3
  $region1: #{tpu_custom_call.1} parent=0
    #allocation2 [shape = 'u8[8192]{0}', space=vmem, size = 0x2000, scoped, tag = 'input window, operand 0']
    #allocation3 [shape = 's32[2]{0}', space=sflag, size = 0x8, scoped, tag = 'scoped memory for tpu_custom_call.1']
    #allocation4 [shape = 's32[2]{0}', space=sflag, size = 0x8, scoped, tag = 'scoped memory for tpu_custom_call.1']
    #allocation5 [shape = 'u8[4096]{0}', space=vmem, size = 0x1000, scoped, tag = 'input window, operand 1, single buffered']
    #allocation6 [shape = 's32[1]{0}', space=sflag, size = 0x4, scoped, tag = 'scoped memory for tpu_custom_call.1']
    #allocation7 [shape = 'u8[8192]{0}', space=vmem, size = 0x2000, scoped, tag = 'output window, operand 0']
    %7 = vsyncpa [#allocation3], 0
    %s8 = scalar_lea.sflag [#allocation3], 1
    %9 = vsyncpa %s8, 0
    %10 = vsyncpa [#allocation6], 0
    %11 = vsyncpa [#allocation4], 0
    %s12 = scalar_lea.sflag [#allocation4], 1
    %13 = vsyncpa %s12, 0
    loop: start=0, step=1, limit=4
    $region2: #{tpu_custom_call.1} parent=1 // loop_pre_header
      _
    $region3: #{tpu_custom_call.1} parent=1 // loop_header
      %s15 = sphi 0, %s19
      %p16 = scmp.ge.s32.totalorder %s15, 4
      %s25 = sphi 0, %s27
      %s28 = sphi 0, %s25
      %s29 = sphi 0, %s28
      %s45 = sphi 0, %s29
      %s49 = sphi 0, %s49
      %s51 = sphi 0, %s49
      %s52 = sphi 0, %s51
      %s66 = sphi 0, %s52
      %s72 = sphi 0, %s74
      %s75 = sphi 0, %s72
      %s76 = sphi 0, %s75
      %s92 = sphi 0, %s76
    $region4: #{tpu_custom_call.1} parent=1 // loop_header_branch
      %18 = sbr.rel (%p16) target = $region8
    $region5: #{tpu_custom_call.1} parent=1 // loop_body
      %s20 = ssub.s32 %s15, 1
      %s21 = ssub.s32 %s15, 2
      %s22 = sadd.s32 %s15, 1
      %s23 = ssub.s32 %s15, %s22
      %p24 = scmp.eq.s32.totalorder %s23, 0
      %s26 = sadd.s32 %s25, 1
      %s27 = scalar_select %p24, %s25, %s26
      %p30 = pneg %p24
      %p31 = scmp.eq.s32.totalorder %s15, 1
      %p32 = por %p30, %p31
      %p33 = scmp.ne.s32.totalorder %s25, %s28
      %p34 = scmp.eq.s32.totalorder %s15, 0
      %p35 = por %p33, %p34
      %p36 = scmp.ne.s32.totalorder %s25, %s28
      %p37 = scmp.eq.s32.totalorder %s20, 1
      %p38 = por %p36, %p37
      %p39 = scmp.ne.s32.totalorder %s28, %s29
      %p40 = scmp.eq.s32.totalorder %s20, 0
      %p41 = por %p39, %p40
      %p42 = scmp.ne.s32.totalorder %s28, %s29
      %p43 = scmp.eq.s32.totalorder %s21, 1
      %p44 = por %p42, %p43
      %p46 = scmp.ne.s32.totalorder %s29, %s45
      %p47 = scmp.eq.s32.totalorder %s21, 0
      %p48 = por %p46, %p47
      %s50 = sadd.s32 %s49, 1
      %p53 = scmp.eq.s32.totalorder %s15, 1
      %p54 = scmp.ne.s32.totalorder %s49, %s51
      %p55 = scmp.eq.s32.totalorder %s15, 0
      %p56 = por %p54, %p55
      %p57 = scmp.ne.s32.totalorder %s49, %s51
      %p58 = scmp.eq.s32.totalorder %s20, 1
      %p59 = por %p57, %p58
      %p60 = scmp.ne.s32.totalorder %s51, %s52
      %p61 = scmp.eq.s32.totalorder %s20, 0
      %p62 = por %p60, %p61
      %p63 = scmp.ne.s32.totalorder %s51, %s52
      %p64 = scmp.eq.s32.totalorder %s21, 1
      %p65 = por %p63, %p64
      %p67 = scmp.ne.s32.totalorder %s52, %s66
      %p68 = scmp.eq.s32.totalorder %s21, 0
      %p69 = por %p67, %p68
      %s70 = ssub.s32 %s15, %s22
      %p71 = scmp.eq.s32.totalorder %s70, 0
      %s73 = sadd.s32 %s72, 1
      %s74 = scalar_select %p71, %s72, %s73
      %p77 = pneg %p71
      %p78 = scmp.eq.s32.totalorder %s15, 1
      %p79 = por %p77, %p78
      %p80 = scmp.ne.s32.totalorder %s72, %s75
      %p81 = scmp.eq.s32.totalorder %s15, 0
      %p82 = por %p80, %p81
      %p83 = scmp.ne.s32.totalorder %s72, %s75
      %p84 = scmp.eq.s32.totalorder %s20, 1
      %p85 = por %p83, %p84
      %p86 = scmp.ne.s32.totalorder %s75, %s76
      %p87 = scmp.eq.s32.totalorder %s20, 0
      %p88 = por %p86, %p87
      %p89 = scmp.ne.s32.totalorder %s75, %s76
      %p90 = scmp.eq.s32.totalorder %s21, 1
      %p91 = por %p89, %p90
      %p93 = scmp.ne.s32.totalorder %s76, %s92
      %p94 = scmp.eq.s32.totalorder %s21, 0
      %p95 = por %p93, %p94
      %p96 = scmp.le.s32.totalorder 1, %s15
      %p97 = scmp.lt.s32.totalorder %s15, 3
      %p98 = pnand %p96, %p97
      %p99 = pneg %p98
      // Predicated region
      $region9: #{tpu_custom_call.1} parent=5 // pred_check
        _
      $region10: #{tpu_custom_call.1} parent=5 // pred_check_branch
        %101 = sbr.rel (%p98) target = $region12
      $region11: #{tpu_custom_call.1} parent=5 // pred_region
        %s102 = ssub.s32 %s15, 1
        // Predicated region
        $region13: #{tpu_custom_call.1} parent=11 // pred_check
          %p103 = pneg %p62
        $region14: #{tpu_custom_call.1} parent=11 // pred_check_branch
          %105 = sbr.rel (%p103) target = $region16
        $region15: #{tpu_custom_call.1} parent=11 // pred_region
          %s107 = ssub.s32 128, 128
          %108 = vsyncadd [#allocation6], %s107
          %s110 = sshll.u32 [#allocation5], 4
          %s111 = int_to_ptr.vmem [resolvable:$true] %s110
          %113 = dma.hbm_to_vmem [thread:$0]  %s1, 128, %s111, [#allocation6]
        $region16: #{tpu_custom_call.1} parent=11 // pred_fallthru
          _
      $region12: #{tpu_custom_call.1} parent=5 // pred_fallthru
        _
      %p114 = scmp.lt.s32.totalorder %s15, 2
      // Predicated region
      $region17: #{tpu_custom_call.1} parent=5 // pred_check
        %p115 = pneg %p114
      $region18: #{tpu_custom_call.1} parent=5 // pred_check_branch
        %117 = sbr.rel (%p115) target = $region20
      $region19: #{tpu_custom_call.1} parent=5 // pred_region
        // Predicated region
        $region21: #{tpu_custom_call.1} parent=19 // pred_check
          %p118 = pneg %p35
        $region22: #{tpu_custom_call.1} parent=19 // pred_check_branch
          %120 = sbr.rel (%p118) target = $region24
        $region23: #{tpu_custom_call.1} parent=19 // pred_region
          %s121 = sand.u32 %s25, 1
          %s122 = scalar_lea.sflag [#allocation3], %s121
          %s123 = sand.u32 %s25, 1
          %s124 = smul.addr %s123, 8
          %s125 = scalar_lea.vmem [#allocation2], %s124
          %s127 = ssub.s32 128, 128
          %128 = vsyncadd %s122, %s127
          %s129 = smul.addr %s15, 128
          %s130 = scalar_lea.hbm %s0, %s129
          %s132 = sshll.u32 %s125, 4
          %s133 = int_to_ptr.vmem [resolvable:$true] %s132
          %135 = dma.hbm_to_vmem [thread:$0]  %s130, 128, %s133, %s122
        $region24: #{tpu_custom_call.1} parent=19 // pred_fallthru
          _
      $region20: #{tpu_custom_call.1} parent=5 // pred_fallthru
        _
      %p136 = scmp.le.s32.totalorder 1, %s15
      %p137 = scmp.lt.s32.totalorder %s15, 3
      %p138 = pnand %p136, %p137
      %p139 = pneg %p138
      // Predicated region
      $region25: #{tpu_custom_call.1} parent=5 // pred_check
        _
      $region26: #{tpu_custom_call.1} parent=5 // pred_check_branch
        %141 = sbr.rel (%p138) target = $region28
      $region27: #{tpu_custom_call.1} parent=5 // pred_region
        %s142 = ssub.s32 %s15, 1
        %s143 = sand.u32 %s28, 1
        %s144 = scalar_lea.sflag [#allocation3], %s143
        %s145 = sand.u32 %s28, 1
        %s146 = smul.addr %s145, 8
        %s147 = scalar_lea.vmem [#allocation2], %s146
        // Predicated region
        $region29: #{tpu_custom_call.1} parent=27 // pred_check
          %p148 = pneg %p41
        $region30: #{tpu_custom_call.1} parent=27 // pred_check_branch
          %150 = sbr.rel (%p148) target = $region32
        $region31: #{tpu_custom_call.1} parent=27 // pred_region
          %151 = dma.done %s144, 128
        $region32: #{tpu_custom_call.1} parent=27 // pred_fallthru
          _
        // Predicated region
        $region33: #{tpu_custom_call.1} parent=27 // pred_check
          %p152 = pneg %p62
        $region34: #{tpu_custom_call.1} parent=27 // pred_check_branch
          %154 = sbr.rel (%p152) target = $region36
        $region35: #{tpu_custom_call.1} parent=27 // pred_region
          %155 = dma.done [#allocation6], 128
        $region36: #{tpu_custom_call.1} parent=27 // pred_fallthru
          _
        %s156 = sand.u32 %s28, 1
        %s157 = scalar_lea.sflag [#allocation3], %s156
        %s158 = sand.u32 %s28, 1
        %s159 = smul.addr %s158, 8
        %s160 = scalar_lea.vmem [#allocation2], %s159
        %p161 = pneg %p41
        %p162 = pneg %p38
        %p163 = pneg %p62
        %p164 = pneg %p59
        %p165 = pneg %p88
        %p166 = pneg %p85
        %s167 = sand.u32 %s75, 1
        %s168 = scalar_lea.sflag [#allocation4], %s167
        %s169 = sand.u32 %s75, 1
        %s170 = smul.addr %s169, 8
        %s171 = scalar_lea.vmem [#allocation7], %s170
        %v172 = vld [vmem:[%s147] sm:$0xff]
        %v173 = vld [vmem:[#allocation5] sm:$0xff]
        %v174 = vadd.f32 %v172, %v173
        %175 = vst [vmem:[%s171] sm:$0xff] %v174
        %s176 = sand.u32 %s75, 1
        %s177 = scalar_lea.sflag [#allocation4], %s176
        %s178 = sand.u32 %s75, 1
        %s179 = smul.addr %s178, 8
        %s180 = scalar_lea.vmem [#allocation7], %s179
        // Predicated region
        $region37: #{tpu_custom_call.1} parent=27 // pred_check
          %p181 = pneg %p85
        $region38: #{tpu_custom_call.1} parent=27 // pred_check_branch
          %183 = sbr.rel (%p181) target = $region40
        $region39: #{tpu_custom_call.1} parent=27 // pred_region
          %s185 = ssub.s32 128, 128
          %186 = vsyncadd %s177, %s185
          %s187 = smul.addr %s20, 128
          %s188 = scalar_lea.hbm %s2, %s187
          %s190 = sshll.u32 %s180, 4
          %s191 = int_to_ptr.vmem [resolvable:$true] %s190
          %193 = dma.vmem_to_hbm [thread:$0]  %s191, 128, %s188, %s177
        $region40: #{tpu_custom_call.1} parent=27 // pred_fallthru
          _
      $region28: #{tpu_custom_call.1} parent=5 // pred_fallthru
        _
      %p194 = scmp.le.s32.totalorder 2, %s15
      // Predicated region
      $region41: #{tpu_custom_call.1} parent=5 // pred_check
        %p195 = pneg %p194
      $region42: #{tpu_custom_call.1} parent=5 // pred_check_branch
        %197 = sbr.rel (%p195) target = $region44
      $region43: #{tpu_custom_call.1} parent=5 // pred_region
        %s198 = ssub.s32 %s15, 2
        // Predicated region
        $region45: #{tpu_custom_call.1} parent=43 // pred_check
          %p199 = pneg %p91
        $region46: #{tpu_custom_call.1} parent=43 // pred_check_branch
          %201 = sbr.rel (%p199) target = $region48
        $region47: #{tpu_custom_call.1} parent=43 // pred_region
          %s202 = sand.u32 %s76, 1
          %s203 = scalar_lea.sflag [#allocation4], %s202
          %s204 = sand.u32 %s76, 1
          %s205 = smul.addr %s204, 8
          %s206 = scalar_lea.vmem [#allocation7], %s205
          %207 = dma.done %s203, 128
        $region48: #{tpu_custom_call.1} parent=43 // pred_fallthru
          _
      $region44: #{tpu_custom_call.1} parent=5 // pred_fallthru
        _
    $region6: #{tpu_custom_call.1} parent=1 // loop_footer
      %s19 = sadd.s32 1, %s15
    $region7: #{tpu_custom_call.1} parent=1 // loop_footer_branch
      %14 = sbr.rel target = $region3
    $region8: #{tpu_custom_call.1} parent=1 // loop_exit
      _
    %208 = vsyncpa [#allocation3], 1
    %s209 = scalar_lea.sflag [#allocation3], 1
    %210 = vsyncpa %s209, 1
    %211 = vsyncpa [#allocation6], 1
    %212 = vsyncpa [#allocation4], 1
    %s213 = scalar_lea.sflag [#allocation4], 1
    %214 = vsyncpa %s213, 1

// kernel: _forward_impl.1
$region0: #{_forward_impl.1}
  #allocation0 [shape = 'u32[]', space=smem, size = 0x4, offset = 0x4, fixed_abs, tag = 'smem constant byte address 0x4 - core index']
  #allocation1 [shape = 'u32[144,128]{1,0:T(1,128)}', space=vmem, size = 0x12000, scoped, tag = 'internal scratch']
  #allocation2 [shape = 'f32[1,1]{1,0:T(1,128)S(1)}', space=vmem, size = 0x200, scoped, tag = 'scoped memory for _forward_impl.1']
  %s0 = inlined_call_operand.vmem [shape: bf16[8,16], index: 0, kind: input, shape index: {}]
  %s1 = inlined_call_operand.vmem [shape: bf16[16,128], index: 1, kind: input, shape index: {}]
  %s2 = inlined_call_operand.vmem [shape: f32[1,128], index: 2, kind: input, shape index: {}]
  %s3 = inlined_call_operand.vmem [shape: bf16[128,128], index: 3, kind: input, shape index: {}]
  %s4 = inlined_call_operand.vmem [shape: f32[1,128], index: 4, kind: input, shape index: {}]
  %s5 = inlined_call_operand.vmem [shape: bf16[128,128], index: 5, kind: input, shape index: {}]
  %s6 = inlined_call_operand.vmem [shape: f32[1,128], index: 6, kind: input, shape index: {}]
  %s7 = inlined_call_operand.vmem [shape: bf16[128,1], index: 7, kind: input, shape index: {}]
  %s8 = inlined_call_operand.<no memory space> [shape: f32[1,1], index: 8, kind: input, shape index: {}]
  %s9 = inlined_call_operand.vmem [shape: f32[8,1], index: 9, kind: output, shape index: {}]
  %s10 = sld [smem:[#allocation0]]
  $region46: #{_forward_impl.1} parent=0
    _
  %s12 = ssub.s32 1, %s10
  %s13 = scalar_select 0, %s12, %s10
  %v14 = vstv %s8
  %15 = vst [vmem:[#allocation2] sm:$0x1] %v14
  // Predicated region
  $region2: #{_forward_impl.1} parent=0 // pred_check
    _
  $region3: #{_forward_impl.1} parent=0 // pred_check_branch
    %17 = sbr.rel (0) target = $region5
  $region4: #{_forward_impl.1} parent=0 // pred_region
    _
  $region5: #{_forward_impl.1} parent=0 // pred_fallthru
    _
  // Predicated region
  $region6: #{_forward_impl.1} parent=0 // pred_check
    _
  $region7: #{_forward_impl.1} parent=0 // pred_check_branch
    %19 = sbr.rel (0) target = $region9
  $region8: #{_forward_impl.1} parent=0 // pred_region
    _
  $region9: #{_forward_impl.1} parent=0 // pred_fallthru
    _
  // Predicated region
  $region10: #{_forward_impl.1} parent=0 // pred_check
    _
  $region11: #{_forward_impl.1} parent=0 // pred_check_branch
    %21 = sbr.rel (0) target = $region13
  $region12: #{_forward_impl.1} parent=0 // pred_region
    _
  $region13: #{_forward_impl.1} parent=0 // pred_fallthru
    _
  // Predicated region
  $region14: #{_forward_impl.1} parent=0 // pred_check
    _
  $region15: #{_forward_impl.1} parent=0 // pred_check_branch
    %23 = sbr.rel (0) target = $region17
  $region16: #{_forward_impl.1} parent=0 // pred_region
    _
  $region17: #{_forward_impl.1} parent=0 // pred_fallthru
    _
  // Predicated region
  $region18: #{_forward_impl.1} parent=0 // pred_check
    _
  $region19: #{_forward_impl.1} parent=0 // pred_check_branch
    %25 = sbr.rel (0) target = $region21
  $region20: #{_forward_impl.1} parent=0 // pred_region
    _
  $region21: #{_forward_impl.1} parent=0 // pred_fallthru
    _
  // Predicated region
  $region22: #{_forward_impl.1} parent=0 // pred_check
    _
  $region23: #{_forward_impl.1} parent=0 // pred_check_branch
    %27 = sbr.rel (0) target = $region25
  $region24: #{_forward_impl.1} parent=0 // pred_region
    _
  $region25: #{_forward_impl.1} parent=0 // pred_fallthru
    _
  // Predicated region
  $region26: #{_forward_impl.1} parent=0 // pred_check
    _
  $region27: #{_forward_impl.1} parent=0 // pred_check_branch
    %29 = sbr.rel (0) target = $region29
  $region28: #{_forward_impl.1} parent=0 // pred_region
    _
  $region29: #{_forward_impl.1} parent=0 // pred_fallthru
    _
  // Predicated region
  $region30: #{_forward_impl.1} parent=0 // pred_check
    _
  $region31: #{_forward_impl.1} parent=0 // pred_check_branch
    %31 = sbr.rel (0) target = $region33
  $region32: #{_forward_impl.1} parent=0 // pred_region
    _
  $region33: #{_forward_impl.1} parent=0 // pred_fallthru
    _
  // Predicated region
  $region34: #{_forward_impl.1} parent=0 // pred_check
    _
  $region35: #{_forward_impl.1} parent=0 // pred_check_branch
    %33 = sbr.rel (0) target = $region37
  $region36: #{_forward_impl.1} parent=0 // pred_region
    _
  $region37: #{_forward_impl.1} parent=0 // pred_fallthru
    _
  %v35 = vld [vmem:[%s0] sm:$0xf]
  %v36 = vld [vmem:[%s1] sm:$0xf]
  %v37 = vld [vmem:[%s1 + $0x4] sm:$0xf]
  %v38 = vld [vmem:[%s2] sm:$0x1]
  %v40 = vlaneseq
  %v41 = vshrl.u32 %v40, 7
  %v42 = vsub.s32 0, %v41
  %v43 = vrot.slane %v38, %v42
  %v47 = vunpack.c.l.b16 %v36
  %v48 = vunpack.c.l.b16 %v37
  %v49 = vpack.c.b16 %v48, %v47
  %vm51 = vcmask 130048
  %v53 = vsel %vm51, %v35, 0
  %55 = vmatprep.subr.bf16.mxu0 0
  %56 = vmatpush1.bf16.msra.mxu0 0
  %57 = vmatprep.subr.bf16.mxu0 0
  %58 = vmatpush1.bf16.msra.mxu0 0
  %59 = vmatprep.subr.bf16.mxu0 0
  %60 = vmatpush1.bf16.msra.mxu0 0
  %61 = vmatprep.subr.bf16.mxu0 0
  %62 = vmatpush1.bf16.msra.mxu0 0
  %63 = vmatprep.subr.bf16.mxu0 0
  %64 = vmatpush1.bf16.msra.mxu0 0
  %65 = vmatprep.subr.bf16.mxu0 0
  %66 = vmatpush1.bf16.msra.mxu0 0
  %67 = vmatprep.subr.bf16.mxu0 0
  %68 = vmatpush1.bf16.msra.mxu0 0
  %69 = vmatprep.subr.bf16.mxu0 0
  %70 = vmatpush1.bf16.msra.mxu0 %v49
  %71 = vmatprep.subr.bf16.mxu0 0
  %72 = vmatpush2.bf16.msra.mxu0 0
  %73 = vmatprep.subr.bf16.mxu0 0
  %74 = vmatpush2.bf16.msra.mxu0 0
  %75 = vmatprep.subr.bf16.mxu0 0
  %76 = vmatpush2.bf16.msra.mxu0 0
  %77 = vmatprep.subr.bf16.mxu0 0
  %78 = vmatpush2.bf16.msra.mxu0 0
  %79 = vmatprep.subr.bf16.mxu0 0
  %80 = vmatpush2.bf16.msra.mxu0 0
  %81 = vmatprep.subr.bf16.mxu0 0
  %82 = vmatpush2.bf16.msra.mxu0 0
  %83 = vmatprep.subr.bf16.mxu0 0
  %84 = vmatpush2.bf16.msra.mxu0 0
  %85 = vmatprep.subr.bf16.mxu0 0
  %86 = vmatpush2.bf16.msra.mxu0 0
  %87 = vmatprep.mubr.bf16.mxu0 0
  %88 = vmatmul.mubr.bf16.gmra.mxu0 %v53
  %v89 = vpop.f32.mrf.mxu0
  %v90 = vadd.f32 %v43, %v89
  %v91 = vpop.f32.mrf.mxu0
  %v92 = vpop.f32.mrf.mxu0
  %v93 = vpop.f32.mrf.mxu0
  %94 = vdwg.mxu0
  %v95 = vmax.f32 %v90, 0.0
  %v96 = vpack.c.bf16 %v95, %v95
  %v97 = vld [vmem:[%s3] sm:$0xf]
  %v98 = vld [vmem:[%s3 + $0x4] sm:$0xf]
  %v99 = vld [vmem:[%s3 + $0x8] sm:$0xf]
  %v100 = vld [vmem:[%s3 + $0xc] sm:$0xf]
  %v101 = vld [vmem:[%s3 + $0x10] sm:$0xf]
  %v102 = vld [vmem:[%s3 + $0x14] sm:$0xf]
  %v103 = vld [vmem:[%s3 + $0x18] sm:$0xf]
  %v104 = vld [vmem:[%s3 + $0x1c] sm:$0xf]
  %v105 = vld [vmem:[%s3 + $0x20] sm:$0xf]
  %v106 = vld [vmem:[%s3 + $0x24] sm:$0xf]
  %v107 = vld [vmem:[%s3 + $0x28] sm:$0xf]
  %v108 = vld [vmem:[%s3 + $0x2c] sm:$0xf]
  %v109 = vld [vmem:[%s3 + $0x30] sm:$0xf]
  %v110 = vld [vmem:[%s3 + $0x34] sm:$0xf]
  %v111 = vld [vmem:[%s3 + $0x38] sm:$0xf]
  %v112 = vld [vmem:[%s3 + $0x3c] sm:$0xf]
  %v113 = vld [vmem:[%s4] sm:$0x1]
  %v115 = vlaneseq
  %v116 = vshrl.u32 %v115, 7
  %v117 = vsub.s32 0, %v116
  %v118 = vrot.slane %v113, %v117
  %v136 = vunpack.c.l.b16 %v97
  %v137 = vunpack.c.l.b16 %v98
  %v138 = vunpack.c.l.b16 %v99
  %v139 = vunpack.c.l.b16 %v100
  %v140 = vunpack.c.l.b16 %v101
  %v141 = vunpack.c.l.b16 %v102
  %v142 = vunpack.c.l.b16 %v103
  %v143 = vunpack.c.l.b16 %v104
  %v144 = vunpack.c.l.b16 %v105
  %v145 = vunpack.c.l.b16 %v106
  %v146 = vunpack.c.l.b16 %v107
  %v147 = vunpack.c.l.b16 %v108
  %v148 = vunpack.c.l.b16 %v109
  %v149 = vunpack.c.l.b16 %v110
  %v150 = vunpack.c.l.b16 %v111
  %v151 = vunpack.c.l.b16 %v112
  %v152 = vpack.c.b16 %v137, %v136
  %v153 = vpack.c.b16 %v139, %v138
  %v154 = vpack.c.b16 %v141, %v140
  %v155 = vpack.c.b16 %v143, %v142
  %v156 = vpack.c.b16 %v145, %v144
  %v157 = vpack.c.b16 %v147, %v146
  %v158 = vpack.c.b16 %v149, %v148
  %v159 = vpack.c.b16 %v151, %v150
  %168 = vmatprep.subr.bf16.mxu0 0
  %169 = vmatpush1.bf16.msra.mxu0 %v159
  %170 = vmatprep.subr.bf16.mxu0 0
  %171 = vmatpush1.bf16.msra.mxu0 %v158
  %172 = vmatprep.subr.bf16.mxu0 0
  %173 = vmatpush1.bf16.msra.mxu0 %v157
  %174 = vmatprep.subr.bf16.mxu0 0
  %175 = vmatpush1.bf16.msra.mxu0 %v156
  %176 = vmatprep.subr.bf16.mxu0 0
  %177 = vmatpush1.bf16.msra.mxu0 %v155
  %178 = vmatprep.subr.bf16.mxu0 0
  %179 = vmatpush1.bf16.msra.mxu0 %v154
  %180 = vmatprep.subr.bf16.mxu0 0
  %181 = vmatpush1.bf16.msra.mxu0 %v153
  %182 = vmatprep.subr.bf16.mxu0 0
  %183 = vmatpush1.bf16.msra.mxu0 %v152
  %184 = vmatprep.subr.bf16.mxu0 0
  %185 = vmatpush2.bf16.msra.mxu0 0
  %186 = vmatprep.subr.bf16.mxu0 0
  %187 = vmatpush2.bf16.msra.mxu0 0
  %188 = vmatprep.subr.bf16.mxu0 0
  %189 = vmatpush2.bf16.msra.mxu0 0
  %190 = vmatprep.subr.bf16.mxu0 0
  %191 = vmatpush2.bf16.msra.mxu0 0
  %192 = vmatprep.subr.bf16.mxu0 0
  %193 = vmatpush2.bf16.msra.mxu0 0
  %194 = vmatprep.subr.bf16.mxu0 0
  %195 = vmatpush2.bf16.msra.mxu0 0
  %196 = vmatprep.subr.bf16.mxu0 0
  %197 = vmatpush2.bf16.msra.mxu0 0
  %198 = vmatprep.subr.bf16.mxu0 0
  %199 = vmatpush2.bf16.msra.mxu0 0
  %200 = vmatprep.mubr.bf16.mxu0 0
  %201 = vmatmul.mubr.bf16.gmra.mxu0 %v96
  %v202 = vpop.f32.mrf.mxu0
  %v203 = vadd.f32 %v118, %v202
  %v204 = vpop.f32.mrf.mxu0
  %v205 = vpop.f32.mrf.mxu0
  %v206 = vpop.f32.mrf.mxu0
  %207 = vdwg.mxu0
  %v208 = vmax.f32 %v203, 0.0
  %v209 = vpack.c.bf16 %v208, %v208
  %v210 = vld [vmem:[%s5] sm:$0xf]
  %v211 = vld [vmem:[%s5 + $0x4] sm:$0xf]
  %v212 = vld [vmem:[%s5 + $0x8] sm:$0xf]
  %v213 = vld [vmem:[%s5 + $0xc] sm:$0xf]
  %v214 = vld [vmem:[%s5 + $0x10] sm:$0xf]
  %v215 = vld [vmem:[%s5 + $0x14] sm:$0xf]
  %v216 = vld [vmem:[%s5 + $0x18] sm:$0xf]
  %v217 = vld [vmem:[%s5 + $0x1c] sm:$0xf]
  %v218 = vld [vmem:[%s5 + $0x20] sm:$0xf]
  %v219 = vld [vmem:[%s5 + $0x24] sm:$0xf]
  %v220 = vld [vmem:[%s5 + $0x28] sm:$0xf]
  %v221 = vld [vmem:[%s5 + $0x2c] sm:$0xf]
  %v222 = vld [vmem:[%s5 + $0x30] sm:$0xf]
  %v223 = vld [vmem:[%s5 + $0x34] sm:$0xf]
  %v224 = vld [vmem:[%s5 + $0x38] sm:$0xf]
  %v225 = vld [vmem:[%s5 + $0x3c] sm:$0xf]
  %v226 = vld [vmem:[%s6] sm:$0x1]
  %v228 = vlaneseq
  %v229 = vshrl.u32 %v228, 7
  %v230 = vsub.s32 0, %v229
  %v231 = vrot.slane %v226, %v230
  %v249 = vunpack.c.l.b16 %v210
  %v250 = vunpack.c.l.b16 %v211
  %v251 = vunpack.c.l.b16 %v212
  %v252 = vunpack.c.l.b16 %v213
  %v253 = vunpack.c.l.b16 %v214
  %v254 = vunpack.c.l.b16 %v215
  %v255 = vunpack.c.l.b16 %v216
  %v256 = vunpack.c.l.b16 %v217
  %v257 = vunpack.c.l.b16 %v218
  %v258 = vunpack.c.l.b16 %v219
  %v259 = vunpack.c.l.b16 %v220
  %v260 = vunpack.c.l.b16 %v221
  %v261 = vunpack.c.l.b16 %v222
  %v262 = vunpack.c.l.b16 %v223
  %v263 = vunpack.c.l.b16 %v224
  %v264 = vunpack.c.l.b16 %v225
  %v265 = vpack.c.b16 %v250, %v249
  %v266 = vpack.c.b16 %v252, %v251
  %v267 = vpack.c.b16 %v254, %v253
  %v268 = vpack.c.b16 %v256, %v255
  %v269 = vpack.c.b16 %v258, %v257
  %v270 = vpack.c.b16 %v260, %v259
  %v271 = vpack.c.b16 %v262, %v261
  %v272 = vpack.c.b16 %v264, %v263
  %281 = vmatprep.subr.bf16.mxu0 0
  %282 = vmatpush1.bf16.msra.mxu0 %v272
  %283 = vmatprep.subr.bf16.mxu0 0
  %284 = vmatpush1.bf16.msra.mxu0 %v271
  %285 = vmatprep.subr.bf16.mxu0 0
  %286 = vmatpush1.bf16.msra.mxu0 %v270
  %287 = vmatprep.subr.bf16.mxu0 0
  %288 = vmatpush1.bf16.msra.mxu0 %v269
  %289 = vmatprep.subr.bf16.mxu0 0
  %290 = vmatpush1.bf16.msra.mxu0 %v268
  %291 = vmatprep.subr.bf16.mxu0 0
  %292 = vmatpush1.bf16.msra.mxu0 %v267
  %293 = vmatprep.subr.bf16.mxu0 0
  %294 = vmatpush1.bf16.msra.mxu0 %v266
  %295 = vmatprep.subr.bf16.mxu0 0
  %296 = vmatpush1.bf16.msra.mxu0 %v265
  %297 = vmatprep.subr.bf16.mxu0 0
  %298 = vmatpush2.bf16.msra.mxu0 0
  %299 = vmatprep.subr.bf16.mxu0 0
  %300 = vmatpush2.bf16.msra.mxu0 0
  %301 = vmatprep.subr.bf16.mxu0 0
  %302 = vmatpush2.bf16.msra.mxu0 0
  %303 = vmatprep.subr.bf16.mxu0 0
  %304 = vmatpush2.bf16.msra.mxu0 0
  %305 = vmatprep.subr.bf16.mxu0 0
  %306 = vmatpush2.bf16.msra.mxu0 0
  %307 = vmatprep.subr.bf16.mxu0 0
  %308 = vmatpush2.bf16.msra.mxu0 0
  %309 = vmatprep.subr.bf16.mxu0 0
  %310 = vmatpush2.bf16.msra.mxu0 0
  %311 = vmatprep.subr.bf16.mxu0 0
  %312 = vmatpush2.bf16.msra.mxu0 0
  %313 = vmatprep.mubr.bf16.mxu0 0
  %314 = vmatmul.mubr.bf16.gmra.mxu0 %v209
  %v315 = vpop.f32.mrf.mxu0
  %v316 = vadd.f32 %v231, %v315
  %v317 = vpop.f32.mrf.mxu0
  %v318 = vpop.f32.mrf.mxu0
  %v319 = vpop.f32.mrf.mxu0
  %320 = vdwg.mxu0
  %v321 = vmax.f32 %v316, 0.0
  %v322 = vpack.c.bf16 %v321, %v321
  %v323 = vld [vmem:[%s7] sm:$0xf]
  %v324 = vld [vmem:[%s7 + $0x4] sm:$0xf]
  %v325 = vld [vmem:[%s7 + $0x8] sm:$0xf]
  %v326 = vld [vmem:[%s7 + $0xc] sm:$0xf]
  %v327 = vld [vmem:[%s7 + $0x10] sm:$0xf]
  %v328 = vld [vmem:[%s7 + $0x14] sm:$0xf]
  %v329 = vld [vmem:[%s7 + $0x18] sm:$0xf]
  %v330 = vld [vmem:[%s7 + $0x1c] sm:$0xf]
  %v331 = vld [vmem:[%s7 + $0x20] sm:$0xf]
  %v332 = vld [vmem:[%s7 + $0x24] sm:$0xf]
  %v333 = vld [vmem:[%s7 + $0x28] sm:$0xf]
  %v334 = vld [vmem:[%s7 + $0x2c] sm:$0xf]
  %v335 = vld [vmem:[%s7 + $0x30] sm:$0xf]
  %v336 = vld [vmem:[%s7 + $0x34] sm:$0xf]
  %v337 = vld [vmem:[%s7 + $0x38] sm:$0xf]
  %v338 = vld [vmem:[%s7 + $0x3c] sm:$0xf]
  %v339 = vld [vmem:[#allocation2] sm:$0x1]
  %v341 = vlaneseq
  %v342 = vshrl.u32 %v341, 7
  %v343 = vsub.s32 0, %v342
  %v344 = vrot.slane %v339, %v343
  %v362 = vunpack.c.l.b16 %v323
  %v363 = vunpack.c.l.b16 %v324
  %v364 = vunpack.c.l.b16 %v325
  %v365 = vunpack.c.l.b16 %v326
  %v366 = vunpack.c.l.b16 %v327
  %v367 = vunpack.c.l.b16 %v328
  %v368 = vunpack.c.l.b16 %v329
  %v369 = vunpack.c.l.b16 %v330
  %v370 = vunpack.c.l.b16 %v331
  %v371 = vunpack.c.l.b16 %v332
  %v372 = vunpack.c.l.b16 %v333
  %v373 = vunpack.c.l.b16 %v334
  %v374 = vunpack.c.l.b16 %v335
  %v375 = vunpack.c.l.b16 %v336
  %v376 = vunpack.c.l.b16 %v337
  %v377 = vunpack.c.l.b16 %v338
  %v378 = vpack.c.b16 %v363, %v362
  %v379 = vpack.c.b16 %v365, %v364
  %v380 = vpack.c.b16 %v367, %v366
  %v381 = vpack.c.b16 %v369, %v368
  %v382 = vpack.c.b16 %v371, %v370
  %v383 = vpack.c.b16 %v373, %v372
  %v384 = vpack.c.b16 %v375, %v374
  %v385 = vpack.c.b16 %v377, %v376
  %394 = vmatprep.subr.bf16.mxu0 0
  %395 = vmatpush1.bf16.msra.mxu0 %v385
  %396 = vmatprep.subr.bf16.mxu0 0
  %397 = vmatpush1.bf16.msra.mxu0 %v384
  %398 = vmatprep.subr.bf16.mxu0 0
  %399 = vmatpush1.bf16.msra.mxu0 %v383
  %400 = vmatprep.subr.bf16.mxu0 0
  %401 = vmatpush1.bf16.msra.mxu0 %v382
  %402 = vmatprep.subr.bf16.mxu0 0
  %403 = vmatpush1.bf16.msra.mxu0 %v381
  %404 = vmatprep.subr.bf16.mxu0 0
  %405 = vmatpush1.bf16.msra.mxu0 %v380
  %406 = vmatprep.subr.bf16.mxu0 0
  %407 = vmatpush1.bf16.msra.mxu0 %v379
  %408 = vmatprep.subr.bf16.mxu0 0
  %409 = vmatpush1.bf16.msra.mxu0 %v378
  %410 = vmatprep.subr.bf16.mxu0 0
  %411 = vmatpush2.bf16.msra.mxu0 0
  %412 = vmatprep.subr.bf16.mxu0 0
  %413 = vmatpush2.bf16.msra.mxu0 0
  %414 = vmatprep.subr.bf16.mxu0 0
  %415 = vmatpush2.bf16.msra.mxu0 0
  %416 = vmatprep.subr.bf16.mxu0 0
  %417 = vmatpush2.bf16.msra.mxu0 0
  %418 = vmatprep.subr.bf16.mxu0 0
  %419 = vmatpush2.bf16.msra.mxu0 0
  %420 = vmatprep.subr.bf16.mxu0 0
  %421 = vmatpush2.bf16.msra.mxu0 0
  %422 = vmatprep.subr.bf16.mxu0 0
  %423 = vmatpush2.bf16.msra.mxu0 0
  %424 = vmatprep.subr.bf16.mxu0 0
  %425 = vmatpush2.bf16.msra.mxu0 0
  %426 = vmatprep.mubr.bf16.mxu0 0
  %427 = vmatmul.mubr.bf16.gmra.mxu0 %v322
  %v428 = vpop.f32.mrf.mxu0
  %v429 = vadd.f32 %v344, %v428
  %v430 = vpop.f32.mrf.mxu0
  %v431 = vpop.f32.mrf.mxu0
  %v432 = vpop.f32.mrf.mxu0
  %433 = vdwg.mxu0
  %vm434 = vcmask 7168
  %435 = vst.msk [vmem:[%s9] sm:$0xff] %vm434, %v429
  // Predicated region
  $region38: #{_forward_impl.1} parent=0 // pred_check
    _
  $region39: #{_forward_impl.1} parent=0 // pred_check_branch
    %437 = sbr.rel (0) target = $region41
  $region40: #{_forward_impl.1} parent=0 // pred_region
    _
  $region41: #{_forward_impl.1} parent=0 // pred_fallthru
    _
  // Predicated region
  $region42: #{_forward_impl.1} parent=0 // pred_check
    _
  $region43: #{_forward_impl.1} parent=0 // pred_check_branch
    %439 = sbr.rel (0) target = $region45
  $region44: #{_forward_impl.1} parent=0 // pred_region
    _
  $region45: #{_forward_impl.1} parent=0 // pred_fallthru
    _

</llo_original>
